<compile_context>
chip_gen: v7x
topology: tpu7x:2x2x1
jax: 0.10.0
libtpu: 0.0.40
codegen_flags: <defaults>
</compile_context>

<pallas_src>
import functools

import jax
import jax.numpy as jnp
import numpy as np
from jax.experimental import pallas as pl
from jax.experimental.pallas import tpu as pltpu


def _kl_div_kernel(s_ref, t_ref, o_ref, *, inv_temperature, rows, block_rows):
    """Writes this block's partial KL sum into a lane-dense (1, 8, 128) tile ([0,0,0])."""
    s = s_ref[...].astype(jnp.float32) * inv_temperature
    t = t_ref[...].astype(jnp.float32) * inv_temperature

    # Numerically-stable softmax pieces over the class (lane) axis.
    t_shift = t - jnp.max(t, axis=-1, keepdims=True)
    t_exp = jnp.exp(t_shift)
    t_sum = jnp.sum(t_exp, axis=-1, keepdims=True)

    s_shift = s - jnp.max(s, axis=-1, keepdims=True)
    s_sum = jnp.sum(jnp.exp(s_shift), axis=-1, keepdims=True)

    # sum_j p_j*(log p_j - log q_j)
    #   = (1/t_sum) * sum_j t_exp_j*(t_shift_j - s_shift_j) + log s_sum - log t_sum
    # (normalization deferred to the per-row scalar instead of a per-element mul).
    dot = jnp.sum(t_exp * (t_shift - s_shift), axis=-1, keepdims=True)
    row_kl = (dot * pl.reciprocal(t_sum, approx=False)
              + (jnp.log(s_sum) - jnp.log(t_sum)))

    # Mask the ragged tail: out-of-bounds rows of the last block contain garbage.
    # jnp.where is a select, so NaN/Inf in masked-out rows are dropped exactly.
    row_ids = (pl.program_id(0) * block_rows
               + jax.lax.broadcasted_iota(jnp.int32, row_kl.shape, 0))
    row_kl = jnp.where(row_ids < rows, row_kl, jnp.float32(0.0))

    partial = jnp.sum(row_kl)

    # Lane-dense, unmasked store of the block partial (exact zeros everywhere else).
    sub = jax.lax.broadcasted_iota(jnp.int32, o_ref.shape, 1)
    lane = jax.lax.broadcasted_iota(jnp.int32, o_ref.shape, 2)
    o_ref[...] = jnp.where((sub == 0) & (lane == 0), partial, jnp.float32(0.0))


def _vmem_cap_bytes():
    """Per-TensorCore VMEM budget base; clamp to 64 MiB (v7x per-TC) for safety."""
    cap = 64 * 1024 * 1024
    try:
        cap = int(pltpu.get_tpu_info().vmem_capacity_bytes)
    except Exception:
        pass
    # The query may report per-chip VMEM; clamp to the smallest per-TC figure
    # across supported generations so v7x (64 MiB/TC) never oversizes tiles.
    return min(cap, 64 * 1024 * 1024)


def _max_rows_for_vmem(classes, in_itemsize, vmem_cap):
    """Largest 8-multiple row tile whose double-buffered inputs + temps fit VMEM."""
    budget = (vmem_cap * 55) // 100
    # 2 inputs x 2 pipeline buffers in the input dtype + ~5 f32 tile-sized temporaries.
    per_row_bytes = classes * (2 * 2 * in_itemsize + 5 * 4)
    br = int(budget // max(per_row_bytes, 1))
    br -= br % 8
    return max(8, br)


def distill_kl_div_loss(student, teacher, temperature=1.0, loss_weight=1.0,
                        block_rows=None):
    """Pallas implementation of DistillKLDivLoss.forward. Returns a scalar f32."""
    assert student.shape == teacher.shape
    batch = student.shape[0]          # PyTorch 'batchmean' divisor = tensor.size(0)
    classes = student.shape[-1]

    # Flatten leading dims; the softmax axis (last dim) is preserved.
    s2 = student.reshape(-1, classes)
    t2 = teacher.reshape(-1, classes)
    rows = s2.shape[0]

    vmem_cap = _vmem_cap_bytes()
    vmem_max_rows = _max_rows_for_vmem(rows if False else classes,
                                       s2.dtype.itemsize, vmem_cap)
    if block_rows is None:
        # ~85% of HBM roofline at 512 rows, ~86% at 1024: cap at 1024 and keep
        # at least 2 grid steps so v7x megacore can shard the "parallel" axis.
        block_rows = min(vmem_max_rows, 1024)
        if rows > 8:
            half = -(-(rows // 2) // 8) * 8
            block_rows = min(block_rows, max(8, half))
    else:
        # Round to a sublane multiple and clamp to the VMEM-safe maximum so a
        # user-supplied value degrades gracefully instead of failing to compile.
        block_rows = max(8, ((int(block_rows) + 7) // 8) * 8)
        block_rows = min(block_rows, vmem_max_rows)

    num_blocks = int(pl.cdiv(rows, block_rows))

    # TODO(synk): for very large class dims (LLM-distillation vocabularies) also tile the
    # class axis with an online/streaming softmax instead of full (block_rows, C) tiles.

    kernel = functools.partial(_kl_div_kernel,
                               inv_temperature=float(1.0 / temperature),
                               rows=int(rows), block_rows=int(block_rows))

    # Leave a few MiB of headroom for Mosaic internal scratch; stays within the
    # physical per-TC VMEM on every generation (cap already clamped to 64 MiB).
    vmem_limit_bytes = max(32 * 1024 * 1024, vmem_cap - 4 * 1024 * 1024)

    partials = pl.pallas_call(
        kernel,
        out_shape=jax.ShapeDtypeStruct((num_blocks, 8, 128), jnp.float32),
        grid=(num_blocks,),
        in_specs=[
            pl.BlockSpec((block_rows, classes), lambda i: (i, 0)),
            pl.BlockSpec((block_rows, classes), lambda i: (i, 0)),
        ],
        out_specs=pl.BlockSpec((1, 8, 128), lambda i: (i, 0, 0)),
        compiler_params=pltpu.CompilerParams(
            dimension_semantics=("parallel",),
            vmem_limit_bytes=int(vmem_limit_bytes),
        ),
    )(s2, t2)

    # Non-[0,0] entries of each partial tile are exact zeros, so a plain sum is exact.
    total = jnp.sum(partials)

    # batchmean (/N), the module's extra /shape[0], times loss_weight * T^2.
    scale = float(loss_weight) * float(temperature) ** 2 / (batch * batch)
    return total * scale


if __name__ == "__main__":
    key = jax.random.PRNGKey(0)
    k_s, k_t = jax.random.split(key)

    # Small logits tensor consistent with the module's forward: [batch, num_classes].
    # N=10 is deliberately not a multiple of 8 to exercise the ragged-tail masking
    # path (2 grid blocks, last one partially valid).
    N, C = 10, 128
    student = jax.random.normal(k_s, (N, C), dtype=jnp.float32)
    teacher = jax.random.normal(k_t, (N, C), dtype=jnp.float32)

    # Deterministic hyperparameters (the module's only "parameters").
    temperature = 2.0
    loss_weight = 0.5

    loss = jax.block_until_ready(
        distill_kl_div_loss(student, teacher, temperature, loss_weight))

    # Pure-JAX reference of the exact PyTorch formula.
    s = student / temperature
    t = teacher / temperature
    log_q = jax.nn.log_softmax(s, axis=-1)
    p = jax.nn.softmax(t, axis=-1)
    log_p = jax.nn.log_softmax(t, axis=-1)
    ref = (jnp.sum(p * (log_p - log_q)) / N / N) * loss_weight * temperature ** 2

    assert np.allclose(np.asarray(loss), np.asarray(ref), rtol=1e-4, atol=1e-5), (loss, ref)
    print("KERNEL_OK")
</pallas_src>

<mosaic_0001>
module attributes {stable_mosaic.version = 11 : i64} {
  func.func @_kl_div_kernel(%arg0: i32, %arg1: memref<8x128xf32, #tpu.memory_space<vmem>>, %arg2: memref<8x128xf32, #tpu.memory_space<vmem>>, %arg3: memref<1x8x128xf32, #tpu.memory_space<vmem>>) attributes {dimension_semantics = [#tpu.dimension_semantics<parallel>], iteration_bounds = array<i64: 2>, scalar_prefetch = 0 : i64, scratch_operands = 0 : i64, tpu.core_type = #tpu.core_type<tc>, window_params = [{transform_indices = @transform_0, window_bounds = array<i64: 8, 128>}, {transform_indices = @transform_1, window_bounds = array<i64: 8, 128>}, {transform_indices = @transform_2, window_bounds = array<i64: 1, 8, 128>}]} {
    %c0 = arith.constant 0 : index
    %c0_0 = arith.constant 0 : index
    %0 = vector.load %arg1[%c0, %c0_0] : memref<8x128xf32, #tpu.memory_space<vmem>>, vector<8x128xf32>
    %cst = arith.constant 5.000000e-01 : f32
    %1 = vector.broadcast %cst : f32 to vector<8x128xf32>
    %2 = arith.mulf %0, %1 : vector<8x128xf32>
    %c0_1 = arith.constant 0 : index
    %c0_2 = arith.constant 0 : index
    %3 = vector.load %arg2[%c0_1, %c0_2] : memref<8x128xf32, #tpu.memory_space<vmem>>, vector<8x128xf32>
    %cst_3 = arith.constant 5.000000e-01 : f32
    %4 = vector.broadcast %cst_3 : f32 to vector<8x128xf32>
    %5 = arith.mulf %3, %4 : vector<8x128xf32>
    %cst_4 = arith.constant dense<0xFF800000> : vector<8xf32>
    %6 = vector.multi_reduction <maximumf>, %5, %cst_4 [1] : vector<8x128xf32> to vector<8xf32>
    %7 = vector.shape_cast %6 : vector<8xf32> to vector<8x1xf32>
    %8 = vector.broadcast %7 : vector<8x1xf32> to vector<8x128xf32>
    %9 = arith.subf %5, %8 : vector<8x128xf32>
    %10 = math.exp %9 : vector<8x128xf32>
    %cst_5 = arith.constant dense<0.000000e+00> : vector<8xf32>
    %11 = vector.multi_reduction <add>, %10, %cst_5 [1] : vector<8x128xf32> to vector<8xf32>
    %12 = vector.shape_cast %11 : vector<8xf32> to vector<8x1xf32>
    %cst_6 = arith.constant dense<0xFF800000> : vector<8xf32>
    %13 = vector.multi_reduction <maximumf>, %2, %cst_6 [1] : vector<8x128xf32> to vector<8xf32>
    %14 = vector.shape_cast %13 : vector<8xf32> to vector<8x1xf32>
    %15 = vector.broadcast %14 : vector<8x1xf32> to vector<8x128xf32>
    %16 = arith.subf %2, %15 : vector<8x128xf32>
    %17 = math.exp %16 : vector<8x128xf32>
    %cst_7 = arith.constant dense<0.000000e+00> : vector<8xf32>
    %18 = vector.multi_reduction <add>, %17, %cst_7 [1] : vector<8x128xf32> to vector<8xf32>
    %19 = vector.shape_cast %18 : vector<8xf32> to vector<8x1xf32>
    %20 = arith.subf %9, %16 : vector<8x128xf32>
    %21 = arith.mulf %10, %20 : vector<8x128xf32>
    %cst_8 = arith.constant dense<0.000000e+00> : vector<8xf32>
    %22 = vector.multi_reduction <add>, %21, %cst_8 [1] : vector<8x128xf32> to vector<8xf32>
    %23 = vector.shape_cast %22 : vector<8xf32> to vector<8x1xf32>
    %24 = tpu.reciprocal %12 : vector<8x1xf32> -> vector<8x1xf32>
    %25 = arith.mulf %23, %24 : vector<8x1xf32>
    %26 = math.log %19 : vector<8x1xf32>
    %27 = math.log %12 : vector<8x1xf32>
    %28 = arith.subf %26, %27 : vector<8x1xf32>
    %29 = arith.addf %25, %28 : vector<8x1xf32>
    %c8_i32 = arith.constant 8 : i32
    %30 = arith.muli %arg0, %c8_i32 : i32
    %31 = tpu.iota {dimensions = array<i32: 0>} : vector<8x1xi32>
    %32 = vector.broadcast %30 : i32 to vector<8x1xi32>
    %33 = arith.addi %32, %31 : vector<8x1xi32>
    %c10_i32 = arith.constant 10 : i32
    %34 = vector.broadcast %c10_i32 : i32 to vector<8x1xi32>
    %35 = arith.cmpi slt, %33, %34 : vector<8x1xi32>
    %cst_9 = arith.constant 0.000000e+00 : f32
    %36 = vector.broadcast %cst_9 : f32 to vector<8x1xf32>
    %37 = arith.select %35, %29, %36 : vector<8x1xi1>, vector<8x1xf32>
    %38 = vector.shape_cast %37 : vector<8x1xf32> to vector<1x8x1xf32>
    %cst_10 = arith.constant dense<0.000000e+00> : vector<1xf32>
    %39 = vector.multi_reduction <add>, %38, %cst_10 [1, 2] : vector<1x8x1xf32> to vector<1xf32>
    %40 = vector.shape_cast %39 : vector<1xf32> to vector<1x1x1xf32>
    %41 = vector.extract %40[0, 0, 0] : f32 from vector<1x1x1xf32>
    %42 = tpu.iota {dimensions = array<i32: 1>} : vector<1x8x128xi32>
    %43 = tpu.iota {dimensions = array<i32: 2>} : vector<1x8x128xi32>
    %c0_i32 = arith.constant 0 : i32
    %44 = vector.broadcast %c0_i32 : i32 to vector<1x8x128xi32>
    %45 = arith.cmpi eq, %42, %44 : vector<1x8x128xi32>
    %c0_i32_11 = arith.constant 0 : i32
    %46 = vector.broadcast %c0_i32_11 : i32 to vector<1x8x128xi32>
    %47 = arith.cmpi eq, %43, %46 : vector<1x8x128xi32>
    %48 = arith.andi %45, %47 : vector<1x8x128xi1>
    %cst_12 = arith.constant 0.000000e+00 : f32
    %49 = vector.broadcast %41 : f32 to vector<1x8x128xf32>
    %50 = vector.broadcast %cst_12 : f32 to vector<1x8x128xf32>
    %51 = arith.select %48, %49, %50 : vector<1x8x128xi1>, vector<1x8x128xf32>
    %c0_13 = arith.constant 0 : index
    %c0_14 = arith.constant 0 : index
    %c0_15 = arith.constant 0 : index
    %52 = vector.load %arg3[%c0_13, %c0_14, %c0_15] : memref<1x8x128xf32, #tpu.memory_space<vmem>>, vector<1x8x128xf32>
    tpu.vector_store %arg3[%c0_13, %c0_14, %c0_15], %51 {strides = array<i32>} : memref<1x8x128xf32, #tpu.memory_space<vmem>>, vector<1x8x128xf32>,
    return
  }
  func.func @transform_0(%arg0: i32) -> (i32, i32) {
    %c0_i32 = arith.constant 0 : i32
    %c0_i32_0 = arith.constant 0 : i32
    return %arg0, %c0_i32 : i32, i32
  }
  func.func @transform_1(%arg0: i32) -> (i32, i32) {
    %c0_i32 = arith.constant 0 : i32
    %c0_i32_0 = arith.constant 0 : i32
    return %arg0, %c0_i32 : i32, i32
  }
  func.func @transform_2(%arg0: i32) -> (i32, i32, i32) {
    %c0_i32 = arith.constant 0 : i32
    %c0_i32_0 = arith.constant 0 : i32
    %c0_i32_1 = arith.constant 0 : i32
    return %arg0, %c0_i32, %c0_i32_0 : i32, i32, i32
  }
}

</mosaic_0001>

<llo_original>
// kernel: tpu_custom_call.1
$region0: #{tpu_custom_call.1}
  #allocation0 [shape = 'u32[]', space=smem, size = 0x4, offset = 0x4, fixed_abs, tag = 'smem constant byte address 0x4 - core index']
  #allocation1 [shape = 'u32[144,128]{1,0:T(1,128)}', space=vmem, size = 0x12000, scoped, tag = 'internal scratch']
  %s0 = inlined_call_operand.hbm [shape: f32[10,128], index: 0, kind: input, shape index: {}]
  %s1 = inlined_call_operand.hbm [shape: f32[10,128], index: 1, kind: input, shape index: {}]
  %s2 = inlined_call_operand.hbm [shape: f32[2,8,128], index: 2, kind: output, shape index: {}]
  %s3 = sld [smem:[#allocation0]]
  $region49: #{tpu_custom_call.1} parent=0
    _
  %s5 = ssub.s32 1, %s3
  %s6 = scalar_select 0, %s5, %s3
  $region1: #{tpu_custom_call.1} parent=0
    #allocation2 [shape = 'u8[8192]{0}', space=vmem, size = 0x2000, scoped, tag = 'input window, operand 0']
    #allocation3 [shape = 's32[2]{0}', space=sflag, size = 0x8, scoped, tag = 'scoped memory for tpu_custom_call.1']
    #allocation4 [shape = 's32[2]{0}', space=sflag, size = 0x8, scoped, tag = 'scoped memory for tpu_custom_call.1']
    #allocation5 [shape = 'u8[8192]{0}', space=vmem, size = 0x2000, scoped, tag = 'input window, operand 1']
    #allocation6 [shape = 's32[2]{0}', space=sflag, size = 0x8, scoped, tag = 'scoped memory for tpu_custom_call.1']
    #allocation7 [shape = 'u8[8192]{0}', space=vmem, size = 0x2000, scoped, tag = 'output window, operand 0']
    %7 = vsyncpa [#allocation3], 0
    %s8 = scalar_lea.sflag [#allocation3], 1
    %9 = vsyncpa %s8, 0
    %10 = vsyncpa [#allocation6], 0
    %s11 = scalar_lea.sflag [#allocation6], 1
    %12 = vsyncpa %s11, 0
    %13 = vsyncpa [#allocation4], 0
    %s14 = scalar_lea.sflag [#allocation4], 1
    %15 = vsyncpa %s14, 0
    loop: start=0, step=1, limit=4
    $region2: #{tpu_custom_call.1} parent=1 // loop_pre_header
      _
    $region3: #{tpu_custom_call.1} parent=1 // loop_header
      %s17 = sphi 0, %s21
      %p18 = scmp.ge.s32.totalorder %s17, 4
      %s27 = sphi 0, %s29
      %s30 = sphi 0, %s27
      %s31 = sphi 0, %s30
      %s47 = sphi 0, %s31
      %s53 = sphi 0, %s55
      %s56 = sphi 0, %s53
      %s57 = sphi 0, %s56
      %s73 = sphi 0, %s57
      %s79 = sphi 0, %s81
      %s82 = sphi 0, %s79
      %s83 = sphi 0, %s82
      %s99 = sphi 0, %s83
    $region4: #{tpu_custom_call.1} parent=1 // loop_header_branch
      %20 = sbr.rel (%p18) target = $region8
    $region5: #{tpu_custom_call.1} parent=1 // loop_body
      %s22 = ssub.s32 %s17, 1
      %s23 = ssub.s32 %s17, 2
      %s24 = sadd.s32 %s17, 1
      %s25 = ssub.s32 %s17, %s24
      %p26 = scmp.eq.s32.totalorder %s25, 0
      %s28 = sadd.s32 %s27, 1
      %s29 = scalar_select %p26, %s27, %s28
      %p32 = pneg %p26
      %p33 = scmp.eq.s32.totalorder %s17, 1
      %p34 = por %p32, %p33
      %p35 = scmp.ne.s32.totalorder %s27, %s30
      %p36 = scmp.eq.s32.totalorder %s17, 0
      %p37 = por %p35, %p36
      %p38 = scmp.ne.s32.totalorder %s27, %s30
      %p39 = scmp.eq.s32.totalorder %s22, 1
      %p40 = por %p38, %p39
      %p41 = scmp.ne.s32.totalorder %s30, %s31
      %p42 = scmp.eq.s32.totalorder %s22, 0
      %p43 = por %p41, %p42
      %p44 = scmp.ne.s32.totalorder %s30, %s31
      %p45 = scmp.eq.s32.totalorder %s23, 1
      %p46 = por %p44, %p45
      %p48 = scmp.ne.s32.totalorder %s31, %s47
      %p49 = scmp.eq.s32.totalorder %s23, 0
      %p50 = por %p48, %p49
      %s51 = ssub.s32 %s17, %s24
      %p52 = scmp.eq.s32.totalorder %s51, 0
      %s54 = sadd.s32 %s53, 1
      %s55 = scalar_select %p52, %s53, %s54
      %p58 = pneg %p52
      %p59 = scmp.eq.s32.totalorder %s17, 1
      %p60 = por %p58, %p59
      %p61 = scmp.ne.s32.totalorder %s53, %s56
      %p62 = scmp.eq.s32.totalorder %s17, 0
      %p63 = por %p61, %p62
      %p64 = scmp.ne.s32.totalorder %s53, %s56
      %p65 = scmp.eq.s32.totalorder %s22, 1
      %p66 = por %p64, %p65
      %p67 = scmp.ne.s32.totalorder %s56, %s57
      %p68 = scmp.eq.s32.totalorder %s22, 0
      %p69 = por %p67, %p68
      %p70 = scmp.ne.s32.totalorder %s56, %s57
      %p71 = scmp.eq.s32.totalorder %s23, 1
      %p72 = por %p70, %p71
      %p74 = scmp.ne.s32.totalorder %s57, %s73
      %p75 = scmp.eq.s32.totalorder %s23, 0
      %p76 = por %p74, %p75
      %s77 = ssub.s32 %s17, %s24
      %p78 = scmp.eq.s32.totalorder %s77, 0
      %s80 = sadd.s32 %s79, 1
      %s81 = scalar_select %p78, %s79, %s80
      %p84 = pneg %p78
      %p85 = scmp.eq.s32.totalorder %s17, 1
      %p86 = por %p84, %p85
      %p87 = scmp.ne.s32.totalorder %s79, %s82
      %p88 = scmp.eq.s32.totalorder %s17, 0
      %p89 = por %p87, %p88
      %p90 = scmp.ne.s32.totalorder %s79, %s82
      %p91 = scmp.eq.s32.totalorder %s22, 1
      %p92 = por %p90, %p91
      %p93 = scmp.ne.s32.totalorder %s82, %s83
      %p94 = scmp.eq.s32.totalorder %s22, 0
      %p95 = por %p93, %p94
      %p96 = scmp.ne.s32.totalorder %s82, %s83
      %p97 = scmp.eq.s32.totalorder %s23, 1
      %p98 = por %p96, %p97
      %p100 = scmp.ne.s32.totalorder %s83, %s99
      %p101 = scmp.eq.s32.totalorder %s23, 0
      %p102 = por %p100, %p101
      %p103 = scmp.le.s32.totalorder 1, %s17
      %p104 = scmp.lt.s32.totalorder %s17, 3
      %p105 = pnand %p103, %p104
      %p106 = pneg %p105
      // Predicated region
      $region9: #{tpu_custom_call.1} parent=5 // pred_check
        _
      $region10: #{tpu_custom_call.1} parent=5 // pred_check_branch
        %108 = sbr.rel (%p105) target = $region12
      $region11: #{tpu_custom_call.1} parent=5 // pred_region
        %s109 = ssub.s32 %s17, 1
      $region12: #{tpu_custom_call.1} parent=5 // pred_fallthru
        _
      %p110 = scmp.lt.s32.totalorder %s17, 2
      // Predicated region
      $region13: #{tpu_custom_call.1} parent=5 // pred_check
        %p111 = pneg %p110
      $region14: #{tpu_custom_call.1} parent=5 // pred_check_branch
        %113 = sbr.rel (%p111) target = $region16
      $region15: #{tpu_custom_call.1} parent=5 // pred_region
        // Predicated region
        $region17: #{tpu_custom_call.1} parent=15 // pred_check
          %p114 = pneg %p37
        $region18: #{tpu_custom_call.1} parent=15 // pred_check_branch
          %116 = sbr.rel (%p114) target = $region20
        $region19: #{tpu_custom_call.1} parent=15 // pred_region
          %s117 = sand.u32 %s27, 1
          %s118 = scalar_lea.sflag [#allocation3], %s117
          %s119 = sand.u32 %s27, 1
          %s120 = smul.addr %s119, 8
          %s121 = scalar_lea.vmem [#allocation2], %s120
          %s123 = ssub.s32 128, 128
          %124 = vsyncadd %s118, %s123
          %s125 = smul.addr %s17, 128
          %s126 = scalar_lea.hbm %s0, %s125
          %s128 = sshll.u32 %s121, 4
          %s129 = int_to_ptr.vmem [resolvable:$true] %s128
          %131 = dma.hbm_to_vmem [thread:$0]  %s126, 128, %s129, %s118
        $region20: #{tpu_custom_call.1} parent=15 // pred_fallthru
          _
        // Predicated region
        $region21: #{tpu_custom_call.1} parent=15 // pred_check
          %p132 = pneg %p63
        $region22: #{tpu_custom_call.1} parent=15 // pred_check_branch
          %134 = sbr.rel (%p132) target = $region24
        $region23: #{tpu_custom_call.1} parent=15 // pred_region
          %s135 = sand.u32 %s53, 1
          %s136 = scalar_lea.sflag [#allocation6], %s135
          %s137 = sand.u32 %s53, 1
          %s138 = smul.addr %s137, 8
          %s139 = scalar_lea.vmem [#allocation5], %s138
          %s141 = ssub.s32 128, 128
          %142 = vsyncadd %s136, %s141
          %s143 = smul.addr %s17, 128
          %s144 = scalar_lea.hbm %s1, %s143
          %s146 = sshll.u32 %s139, 4
          %s147 = int_to_ptr.vmem [resolvable:$true] %s146
          %149 = dma.hbm_to_vmem [thread:$0]  %s144, 128, %s147, %s136
        $region24: #{tpu_custom_call.1} parent=15 // pred_fallthru
          _
      $region16: #{tpu_custom_call.1} parent=5 // pred_fallthru
        _
      %p150 = scmp.le.s32.totalorder 1, %s17
      %p151 = scmp.lt.s32.totalorder %s17, 3
      %p152 = pnand %p150, %p151
      %p153 = pneg %p152
      // Predicated region
      $region25: #{tpu_custom_call.1} parent=5 // pred_check
        _
      $region26: #{tpu_custom_call.1} parent=5 // pred_check_branch
        %155 = sbr.rel (%p152) target = $region28
      $region27: #{tpu_custom_call.1} parent=5 // pred_region
        %s156 = ssub.s32 %s17, 1
        %s157 = sand.u32 %s30, 1
        %s158 = scalar_lea.sflag [#allocation3], %s157
        %s159 = sand.u32 %s30, 1
        %s160 = smul.addr %s159, 8
        %s161 = scalar_lea.vmem [#allocation2], %s160
        // Predicated region
        $region29: #{tpu_custom_call.1} parent=27 // pred_check
          %p162 = pneg %p43
        $region30: #{tpu_custom_call.1} parent=27 // pred_check_branch
          %164 = sbr.rel (%p162) target = $region32
        $region31: #{tpu_custom_call.1} parent=27 // pred_region
          %165 = dma.done %s158, 128
        $region32: #{tpu_custom_call.1} parent=27 // pred_fallthru
          _
        %s166 = sand.u32 %s56, 1
        %s167 = scalar_lea.sflag [#allocation6], %s166
        %s168 = sand.u32 %s56, 1
        %s169 = smul.addr %s168, 8
        %s170 = scalar_lea.vmem [#allocation5], %s169
        // Predicated region
        $region33: #{tpu_custom_call.1} parent=27 // pred_check
          %p171 = pneg %p69
        $region34: #{tpu_custom_call.1} parent=27 // pred_check_branch
          %173 = sbr.rel (%p171) target = $region36
        $region35: #{tpu_custom_call.1} parent=27 // pred_region
          %174 = dma.done %s167, 128
        $region36: #{tpu_custom_call.1} parent=27 // pred_fallthru
          _
        %s175 = sand.u32 %s30, 1
        %s176 = scalar_lea.sflag [#allocation3], %s175
        %s177 = sand.u32 %s30, 1
        %s178 = smul.addr %s177, 8
        %s179 = scalar_lea.vmem [#allocation2], %s178
        %p180 = pneg %p43
        %p181 = pneg %p40
        %s182 = sand.u32 %s56, 1
        %s183 = scalar_lea.sflag [#allocation6], %s182
        %s184 = sand.u32 %s56, 1
        %s185 = smul.addr %s184, 8
        %s186 = scalar_lea.vmem [#allocation5], %s185
        %p187 = pneg %p69
        %p188 = pneg %p66
        %p189 = pneg %p95
        %p190 = pneg %p92
        %s191 = sand.u32 %s82, 1
        %s192 = scalar_lea.sflag [#allocation4], %s191
        %s193 = sand.u32 %s82, 1
        %s194 = smul.addr %s193, 8
        %s195 = scalar_lea.vmem [#allocation7], %s194
        %v196 = vld [vmem:[%s161] sm:$0xff]
        %v197 = vmul.f32 %v196, 0.5
        %v198 = vld [vmem:[%s170] sm:$0xff]
        %v199 = vmul.f32 %v198, 0.5
        %200 = vmax.xlane.f32.xlu0 %v199
        %v201 = vpop.xlane.xlu0 %200
        %v202 = vsub.f32 %v199, %v201
        %v203 = vmul.f32 %v202, 1.442695
        %v204 = vpow.pop %v203
        %205 = vadd.xlane.f32.xlu0 %v204
        %v206 = vpop.xlane.xlu0 %205
        %207 = vmax.xlane.f32.xlu0 %v197
        %v208 = vpop.xlane.xlu0 %207
        %v209 = vsub.f32 %v197, %v208
        %v210 = vmul.f32 %v209, 1.442695
        %v211 = vpow.pop %v210
        %212 = vadd.xlane.f32.xlu0 %v211
        %v213 = vpop.xlane.xlu0 %212
        %v214 = vsub.f32 %v202, %v209
        %v215 = vmul.f32 %v204, %v214
        %216 = vadd.xlane.f32.xlu0 %v215
        %v217 = vpop.xlane.xlu0 %216
        %v218 = vrcp.pop %v206
        %v219 = vmul.f32 %v217, %v218
        %v220 = vlog2.pop %v213
        %v221 = vmul.f32 %v220, 0.6931472
        %v222 = vlog2.pop %v206
        %v223 = vmul.f32 %v222, 0.6931472
        %v224 = vsub.f32 %v221, %v223
        %v225 = vadd.f32 %v219, %v224
        %s226 = smul.u32 %s22, 8
        %v227 = vlaneseq
        %v228 = vshrl.u32 %v227, 7
        %v229 = vstv %s226
        %v230 = vadd.s32 %v229, %v228
        %vm231 = vcmp.lt.s32.totalorder %v230, 10
        %v232 = vsel %vm231, %v225, 0.0
        %vm233 = vcmask 7168
        %v234 = vsel %vm233, %v232, 0.0
        %235 = vadd.xlane.f32.xlu0 %v234
        %v236 = vpop.xlane.xlu0 %235
        %v237 = vrot.slane %v236, 4
        %v238 = vadd.f32 %v236, %v237
        %v239 = vrot.slane %v238, 2
        %v240 = vadd.f32 %v238, %v239
        %v241 = vrot.slane %v240, 1
        %v242 = vadd.f32 %v240, %v241
        %s243 = vtos %v242
        %v244 = vlaneseq
        %v245 = vand.u32 %v244, 127
        %vm246 = vcmp.eq.s32.totalorder %v228, 0
        %vm247 = vcmp.eq.s32.totalorder %v245, 0
        %vm248 = vmand %vm246, %vm247
        %v249 = vstv %s243
        %v250 = vsel %vm248, %v249, 0.0
        %251 = vst [vmem:[%s195] sm:$0xff] %v250
        %s252 = sand.u32 %s82, 1
        %s253 = scalar_lea.sflag [#allocation4], %s252
        %s254 = sand.u32 %s82, 1
        %s255 = smul.addr %s254, 8
        %s256 = scalar_lea.vmem [#allocation7], %s255
        // Predicated region
        $region37: #{tpu_custom_call.1} parent=27 // pred_check
          %p257 = pneg %p92
        $region38: #{tpu_custom_call.1} parent=27 // pred_check_branch
          %259 = sbr.rel (%p257) target = $region40
        $region39: #{tpu_custom_call.1} parent=27 // pred_region
          %s261 = ssub.s32 128, 128
          %262 = vsyncadd %s253, %s261
          %s263 = smul.addr %s22, 128
          %s264 = scalar_lea.hbm %s2, %s263
          %s266 = sshll.u32 %s256, 4
          %s267 = int_to_ptr.vmem [resolvable:$true] %s266
          %269 = dma.vmem_to_hbm [thread:$0]  %s267, 128, %s264, %s253
        $region40: #{tpu_custom_call.1} parent=27 // pred_fallthru
          _
      $region28: #{tpu_custom_call.1} parent=5 // pred_fallthru
        _
      %p270 = scmp.le.s32.totalorder 2, %s17
      // Predicated region
      $region41: #{tpu_custom_call.1} parent=5 // pred_check
        %p271 = pneg %p270
      $region42: #{tpu_custom_call.1} parent=5 // pred_check_branch
        %273 = sbr.rel (%p271) target = $region44
      $region43: #{tpu_custom_call.1} parent=5 // pred_region
        %s274 = ssub.s32 %s17, 2
        // Predicated region
        $region45: #{tpu_custom_call.1} parent=43 // pred_check
          %p275 = pneg %p98
        $region46: #{tpu_custom_call.1} parent=43 // pred_check_branch
          %277 = sbr.rel (%p275) target = $region48
        $region47: #{tpu_custom_call.1} parent=43 // pred_region
          %s278 = sand.u32 %s83, 1
          %s279 = scalar_lea.sflag [#allocation4], %s278
          %s280 = sand.u32 %s83, 1
          %s281 = smul.addr %s280, 8
          %s282 = scalar_lea.vmem [#allocation7], %s281
          %283 = dma.done %s279, 128
        $region48: #{tpu_custom_call.1} parent=43 // pred_fallthru
          _
      $region44: #{tpu_custom_call.1} parent=5 // pred_fallthru
        _
    $region6: #{tpu_custom_call.1} parent=1 // loop_footer
      %s21 = sadd.s32 1, %s17
    $region7: #{tpu_custom_call.1} parent=1 // loop_footer_branch
      %16 = sbr.rel target = $region3
    $region8: #{tpu_custom_call.1} parent=1 // loop_exit
      _
    %284 = vsyncpa [#allocation3], 1
    %s285 = scalar_lea.sflag [#allocation3], 1
    %286 = vsyncpa %s285, 1
    %287 = vsyncpa [#allocation6], 1
    %s288 = scalar_lea.sflag [#allocation6], 1
    %289 = vsyncpa %s288, 1
    %290 = vsyncpa [#allocation4], 1
    %s291 = scalar_lea.sflag [#allocation4], 1
    %292 = vsyncpa %s291, 1

</llo_original>
